<compile_context>
chip_gen: v6e
topology: v6e:2x2x1
jax: 0.10.0
libtpu: 0.0.40
codegen_flags: <defaults>
</compile_context>

<pallas_src>
import jax
import jax.numpy as jnp
from jax.experimental import pallas as pl
from jax.experimental.pallas import tpu as pltpu

HIDDEN = 128
SUBLANE = 8
DEFAULT_TILE_B = 2048  # big tiles amortize the ~0.35us/grid-step overhead; VMEM is cheap here


def _round_up(x, m):
    return ((x + m - 1) // m) * m


def _choose_tile_b(B, tile_b):
    """Batch tile: multiple of 8 (or the full batch), capped so the grid has at
    least 2 steps whenever B allows it (keeps both v7x TensorCores busy)."""
    if B <= SUBLANE:
        return B                      # single block, full (possibly <8) batch dim
    two_step_cap = _round_up((B + 1) // 2, SUBLANE)
    tb = max(SUBLANE, min(tile_b, two_step_cap))
    if tb >= B:
        return B
    return tb


def _mlp_kernel(x_ref, w1_ref, b1_ref, w2_ref, b2_ref, w3_ref, o_ref):
    mm_dtype = w1_ref.dtype
    # Cast the x tile in VMEM (free VPU work hidden under the DMA pipeline).
    x = x_ref[...].astype(mm_dtype)
    # dense1 + relu (MXU accumulates in f32; bias-add / ReLU in f32 on the VPU)
    h1 = jnp.dot(x, w1_ref[...], preferred_element_type=jnp.float32)
    h1 = jnp.maximum(h1 + b1_ref[...], 0.0)
    # dense2 + relu
    h2 = jnp.dot(h1.astype(mm_dtype), w2_ref[...],
                 preferred_element_type=jnp.float32)
    h2 = jnp.maximum(h2 + b2_ref[...], 0.0)
    # dense3 (no bias)
    o_ref[...] = jnp.dot(h2.astype(mm_dtype), w3_ref[...],
                         preferred_element_type=jnp.float32).astype(o_ref.dtype)


def mlp_forward(x, w1, b1, w2, b2, w3, *, tile_b=DEFAULT_TILE_B,
                matmul_dtype=jnp.bfloat16):
    """Forward pass. Weights are (in, out); biases are (out,) or (1, out).
    matmul_dtype=jnp.float32 gives exact f32 parity; bf16 is the fast default."""
    B, n_in = x.shape
    hidden = w1.shape[1]
    n_out = w3.shape[1]

    mm = jnp.dtype(matmul_dtype)
    f32 = jnp.dtype(jnp.float32)

    # Weights are tiny -> one-time cast outside the kernel is cheap; x stays as-is.
    w1_c = w1.astype(mm)
    w2_c = w2.astype(mm)
    w3_c = w3.astype(mm)
    b1_c = b1.reshape(1, hidden).astype(jnp.float32)
    b2_c = b2.reshape(1, hidden).astype(jnp.float32)

    tb = _choose_tile_b(B, tile_b)
    grid = (pl.cdiv(B, tb),)

    flops = 2 * B * (n_in * hidden + hidden * hidden + hidden * n_out)
    bytes_accessed = (
        B * n_in * jnp.dtype(x.dtype).itemsize          # x (read once, unpadded)
        + (n_in * hidden + hidden * hidden + hidden * n_out) * mm.itemsize  # weights
        + 2 * hidden * f32.itemsize                     # biases
        + B * n_out * f32.itemsize                      # out (unpadded writeback)
    )

    # Double-buffered x/out tiles + resident weights; only raise the scoped VMEM
    # limit if this ever gets large (guardrail for v7x's 64 MiB physical VMEM).
    vmem_needed = (
        2 * tb * n_in * jnp.dtype(x.dtype).itemsize
        + 2 * tb * n_out * f32.itemsize
        + (n_in * hidden + hidden * hidden + hidden * n_out) * mm.itemsize
        + 2 * hidden * f32.itemsize
    )
    vmem_limit = None
    if vmem_needed > 24 * 1024 * 1024:
        vmem_limit = min(int(vmem_needed * 2), 100 * 1024 * 1024)

    out = pl.pallas_call(
        _mlp_kernel,
        out_shape=jax.ShapeDtypeStruct((B, n_out), jnp.float32),
        grid=grid,
        in_specs=[
            pl.BlockSpec((tb, n_in), lambda i: (i, 0)),        # x: batch-tiled, full K dim
            pl.BlockSpec((n_in, hidden), lambda i: (0, 0)),    # w1: VMEM-resident
            pl.BlockSpec((1, hidden), lambda i: (0, 0)),       # b1
            pl.BlockSpec((hidden, hidden), lambda i: (0, 0)),  # w2
            pl.BlockSpec((1, hidden), lambda i: (0, 0)),       # b2
            pl.BlockSpec((hidden, n_out), lambda i: (0, 0)),   # w3: full N dim (no pad)
        ],
        out_specs=pl.BlockSpec((tb, n_out), lambda i: (i, 0)),  # exact (B, n_out), no slice
        compiler_params=pltpu.CompilerParams(
            dimension_semantics=("parallel",),
            vmem_limit_bytes=vmem_limit),
        cost_estimate=pl.CostEstimate(
            flops=flops, transcendentals=0, bytes_accessed=bytes_accessed),
    )(x, w1_c, b1_c, w2_c, b2_c, w3_c)

    return out


def init_params(key, n_in, n_out, hidden=HIDDEN):
    """Deterministic init mimicking PyTorch nn.Linear defaults
    (uniform +/- 1/sqrt(fan_in)); dense3 weight is zeroed like the module."""
    k1, k2, k3, k4 = jax.random.split(key, 4)
    bnd1 = 1.0 / jnp.sqrt(n_in)
    w1 = jax.random.uniform(k1, (n_in, hidden), jnp.float32, -bnd1, bnd1)
    b1 = jax.random.uniform(k2, (1, hidden), jnp.float32, -bnd1, bnd1)
    bnd2 = 1.0 / jnp.sqrt(hidden)
    w2 = jax.random.uniform(k3, (hidden, hidden), jnp.float32, -bnd2, bnd2)
    b2 = jax.random.uniform(k4, (1, hidden), jnp.float32, -bnd2, bnd2)
    w3 = jnp.zeros((hidden, n_out), jnp.float32)  # dense3.weight.zero_()
    return w1, b1, w2, b2, w3


def reference_forward(x, w1, b1, w2, b2, w3):
    h1 = jnp.maximum(x @ w1 + b1, 0.0)
    h2 = jnp.maximum(h1 @ w2 + b2, 0.0)
    return h2 @ w3


if __name__ == "__main__":
    key = jax.random.PRNGKey(0)
    kx, kp, kw3, kx2 = jax.random.split(key, 4)

    B, n_in, n_out = 8, 32, 16
    x = jax.random.normal(kx, (B, n_in), jnp.float32)
    w1, b1, w2, b2, w3 = init_params(kp, n_in, n_out)

    # 1) Module-default semantics (dense3 weight zeroed), f32 exact-parity mode.
    out = jax.block_until_ready(
        mlp_forward(x, w1, b1, w2, b2, w3, matmul_dtype=jnp.float32))
    ref = reference_forward(x, w1, b1, w2, b2, w3)
    assert out.shape == (B, n_out)
    assert jnp.allclose(out, ref, atol=1e-5, rtol=1e-5)

    # 2) Nonzero dense3 weight, non-divisible batch (partial last block, >=2 grid
    #    steps for v7x), default bf16 fast path.
    B2 = 300
    x2 = jax.random.normal(kx2, (B2, n_in), jnp.float32)
    w3_nz = jax.random.uniform(kw3, (HIDDEN, n_out), jnp.float32, -0.1, 0.1)
    out2 = jax.block_until_ready(mlp_forward(x2, w1, b1, w2, b2, w3_nz))
    ref2 = reference_forward(x2, w1, b1, w2, b2, w3_nz)
    assert out2.shape == (B2, n_out)
    assert jnp.allclose(out2, ref2, atol=5e-2, rtol=5e-2)

    # 3) f32 exact parity on the same larger, non-divisible batch.
    out3 = jax.block_until_ready(
        mlp_forward(x2, w1, b1, w2, b2, w3_nz, matmul_dtype=jnp.float32))
    assert jnp.allclose(out3, ref2, atol=1e-4, rtol=1e-4)

    print("KERNEL_OK")
</pallas_src>

<mosaic_0001>
module attributes {stable_mosaic.version = 11 : i64} {
  func.func @_mlp_kernel(%arg0: i32, %arg1: memref<8x32xf32, #tpu.memory_space<vmem>>, %arg2: memref<32x128xf32, #tpu.memory_space<vmem>>, %arg3: memref<1x128xf32, #tpu.memory_space<vmem>>, %arg4: memref<128x128xf32, #tpu.memory_space<vmem>>, %arg5: memref<1x128xf32, #tpu.memory_space<vmem>>, %arg6: memref<128x16xf32, #tpu.memory_space<vmem>>, %arg7: memref<8x16xf32, #tpu.memory_space<vmem>>) attributes {dimension_semantics = [#tpu.dimension_semantics<parallel>], iteration_bounds = array<i64: 1>, scalar_prefetch = 0 : i64, scratch_operands = 0 : i64, tpu.core_type = #tpu.core_type<tc>, window_params = [{transform_indices = @transform_0, window_bounds = array<i64: 8, 32>}, {pipeline_mode = #tpu.pipeline_mode<synchronous>, transform_indices = @transform_1, window_bounds = array<i64: 32, 128>}, {pipeline_mode = #tpu.pipeline_mode<synchronous>, transform_indices = @transform_2, window_bounds = array<i64: 1, 128>}, {pipeline_mode = #tpu.pipeline_mode<synchronous>, transform_indices = @transform_3, window_bounds = array<i64: 128, 128>}, {pipeline_mode = #tpu.pipeline_mode<synchronous>, transform_indices = @transform_4, window_bounds = array<i64: 1, 128>}, {pipeline_mode = #tpu.pipeline_mode<synchronous>, transform_indices = @transform_5, window_bounds = array<i64: 128, 16>}, {transform_indices = @transform_6, window_bounds = array<i64: 8, 16>}]} {
    %c0 = arith.constant 0 : index
    %c0_0 = arith.constant 0 : index
    %0 = vector.load %arg1[%c0, %c0_0] : memref<8x32xf32, #tpu.memory_space<vmem>>, vector<8x32xf32>
    %c0_1 = arith.constant 0 : index
    %c0_2 = arith.constant 0 : index
    %1 = vector.load %arg2[%c0_1, %c0_2] : memref<32x128xf32, #tpu.memory_space<vmem>>, vector<32x128xf32>
    %cst = arith.constant dense<0.000000e+00> : vector<8x128xf32>
    %2 = tpu.matmul %0, %1, %cst {dimension_numbers = #tpu.dot_dimension_numbers<[1], [0], [0], [1], [0, 0, 1, 1], [], []>} : vector<8x32xf32>, vector<32x128xf32>, vector<8x128xf32> -> vector<8x128xf32>
    %c0_3 = arith.constant 0 : index
    %c0_4 = arith.constant 0 : index
    %3 = vector.load %arg3[%c0_3, %c0_4] : memref<1x128xf32, #tpu.memory_space<vmem>>, vector<1x128xf32>
    %4 = vector.broadcast %3 : vector<1x128xf32> to vector<8x128xf32>
    %5 = arith.addf %2, %4 : vector<8x128xf32>
    %cst_5 = arith.constant 0.000000e+00 : f32
    %6 = vector.broadcast %cst_5 : f32 to vector<8x128xf32>
    %7 = arith.maximumf %5, %6 : vector<8x128xf32>
    %c0_6 = arith.constant 0 : index
    %c0_7 = arith.constant 0 : index
    %8 = vector.load %arg4[%c0_6, %c0_7] : memref<128x128xf32, #tpu.memory_space<vmem>>, vector<128x128xf32>
    %cst_8 = arith.constant dense<0.000000e+00> : vector<8x128xf32>
    %9 = tpu.matmul %7, %8, %cst_8 {dimension_numbers = #tpu.dot_dimension_numbers<[1], [0], [0], [1], [0, 0, 1, 1], [], []>} : vector<8x128xf32>, vector<128x128xf32>, vector<8x128xf32> -> vector<8x128xf32>
    %c0_9 = arith.constant 0 : index
    %c0_10 = arith.constant 0 : index
    %10 = vector.load %arg5[%c0_9, %c0_10] : memref<1x128xf32, #tpu.memory_space<vmem>>, vector<1x128xf32>
    %11 = vector.broadcast %10 : vector<1x128xf32> to vector<8x128xf32>
    %12 = arith.addf %9, %11 : vector<8x128xf32>
    %cst_11 = arith.constant 0.000000e+00 : f32
    %13 = vector.broadcast %cst_11 : f32 to vector<8x128xf32>
    %14 = arith.maximumf %12, %13 : vector<8x128xf32>
    %c0_12 = arith.constant 0 : index
    %c0_13 = arith.constant 0 : index
    %15 = vector.load %arg6[%c0_12, %c0_13] : memref<128x16xf32, #tpu.memory_space<vmem>>, vector<128x16xf32>
    %cst_14 = arith.constant dense<0.000000e+00> : vector<8x16xf32>
    %16 = tpu.matmul %14, %15, %cst_14 {dimension_numbers = #tpu.dot_dimension_numbers<[1], [0], [0], [1], [0, 0, 1, 1], [], []>} : vector<8x128xf32>, vector<128x16xf32>, vector<8x16xf32> -> vector<8x16xf32>
    %c0_15 = arith.constant 0 : index
    %c0_16 = arith.constant 0 : index
    %17 = vector.load %arg7[%c0_15, %c0_16] : memref<8x16xf32, #tpu.memory_space<vmem>>, vector<8x16xf32>
    tpu.vector_store %arg7[%c0_15, %c0_16], %16 {strides = array<i32>} : memref<8x16xf32, #tpu.memory_space<vmem>>, vector<8x16xf32>,
    return
  }
  func.func @transform_0(%arg0: i32) -> (i32, i32) {
    %c0_i32 = arith.constant 0 : i32
    %c0_i32_0 = arith.constant 0 : i32
    return %arg0, %c0_i32 : i32, i32
  }
  func.func @transform_1(%arg0: i32) -> (i32, i32) {
    %c0_i32 = arith.constant 0 : i32
    %c0_i32_0 = arith.constant 0 : i32
    %c0_i32_1 = arith.constant 0 : i32
    return %c0_i32, %c0_i32_0 : i32, i32
  }
  func.func @transform_2(%arg0: i32) -> (i32, i32) {
    %c0_i32 = arith.constant 0 : i32
    %c0_i32_0 = arith.constant 0 : i32
    %c0_i32_1 = arith.constant 0 : i32
    return %c0_i32, %c0_i32_0 : i32, i32
  }
  func.func @transform_3(%arg0: i32) -> (i32, i32) {
    %c0_i32 = arith.constant 0 : i32
    %c0_i32_0 = arith.constant 0 : i32
    %c0_i32_1 = arith.constant 0 : i32
    return %c0_i32, %c0_i32_0 : i32, i32
  }
  func.func @transform_4(%arg0: i32) -> (i32, i32) {
    %c0_i32 = arith.constant 0 : i32
    %c0_i32_0 = arith.constant 0 : i32
    %c0_i32_1 = arith.constant 0 : i32
    return %c0_i32, %c0_i32_0 : i32, i32
  }
  func.func @transform_5(%arg0: i32) -> (i32, i32) {
    %c0_i32 = arith.constant 0 : i32
    %c0_i32_0 = arith.constant 0 : i32
    %c0_i32_1 = arith.constant 0 : i32
    return %c0_i32, %c0_i32_0 : i32, i32
  }
  func.func @transform_6(%arg0: i32) -> (i32, i32) {
    %c0_i32 = arith.constant 0 : i32
    %c0_i32_0 = arith.constant 0 : i32
    return %arg0, %c0_i32 : i32, i32
  }
}

</mosaic_0001>

<llo_original>
// kernel: tpu_custom_call.1
$region0: #{tpu_custom_call.1}
  #allocation0 [shape = 'u32[]', space=smem, size = 0x4, offset = 0x4, fixed_abs, tag = 'smem constant byte address 0x4 - core index']
  #allocation1 [shape = 'u32[144,128]{1,0:T(1,128)}', space=vmem, size = 0x12000, scoped, tag = 'internal scratch']
  %s0 = inlined_call_operand.vmem [shape: f32[8,32], index: 0, kind: input, shape index: {}]
  %s1 = inlined_call_operand.hbm [shape: f32[32,128], index: 1, kind: input, shape index: {}]
  %s2 = inlined_call_operand.vmem [shape: f32[1,128], index: 2, kind: input, shape index: {}]
  %s3 = inlined_call_operand.vmem [shape: f32[128,128], index: 3, kind: input, shape index: {}]
  %s4 = inlined_call_operand.vmem [shape: f32[1,128], index: 4, kind: input, shape index: {}]
  %s5 = inlined_call_operand.vmem [shape: f32[128,16], index: 5, kind: input, shape index: {}]
  %s6 = inlined_call_operand.hbm [shape: f32[8,16], index: 6, kind: output, shape index: {}]
  %s7 = sld [smem:[#allocation0]]
  $region38: #{tpu_custom_call.1} parent=0
    _
  %s9 = ssub.s32 1, %s7
  %s10 = scalar_select 0, %s9, %s7
  $region1: #{tpu_custom_call.1} parent=0
    #allocation2 [shape = 'u8[16384]{0}', space=vmem, size = 0x4000, scoped, tag = 'input window, operand 1, single buffered']
    #allocation3 [shape = 's32[1]{0}', space=sflag, size = 0x4, scoped, tag = 'scoped memory for tpu_custom_call.1']
    #allocation4 [shape = 's32[1]{0}', space=sflag, size = 0x4, scoped, tag = 'scoped memory for tpu_custom_call.1']
    #allocation5 [shape = 'u8[4096]{0}', space=vmem, size = 0x1000, scoped, tag = 'output window, operand 0, single buffered']
    %11 = vsyncpa [#allocation3], 0
    %12 = vsyncpa [#allocation4], 0
    // Predicated region
    $region2: #{tpu_custom_call.1} parent=1 // pred_check
      _
    $region3: #{tpu_custom_call.1} parent=1 // pred_check_branch
      %14 = sbr.rel (0) target = $region5
    $region4: #{tpu_custom_call.1} parent=1 // pred_region
      _
    $region5: #{tpu_custom_call.1} parent=1 // pred_fallthru
      _
    // Predicated region
    $region6: #{tpu_custom_call.1} parent=1 // pred_check
      _
    $region7: #{tpu_custom_call.1} parent=1 // pred_check_branch
      %16 = sbr.rel (0) target = $region9
    $region8: #{tpu_custom_call.1} parent=1 // pred_region
      %s18 = ssub.s32 512, 512
      %19 = vsyncadd [#allocation3], %s18
      %s20 = sshll.u32 [#allocation2], 4
      %s21 = int_to_ptr.vmem [resolvable:$true] %s20
      %26 = dma.hbm_to_vmem [thread:$0]  %s1, 512, %s21, [#allocation3], 128, 128, 8
    $region9: #{tpu_custom_call.1} parent=1 // pred_fallthru
      _
    // Predicated region
    $region10: #{tpu_custom_call.1} parent=1 // pred_check
      _
    $region11: #{tpu_custom_call.1} parent=1 // pred_check_branch
      %28 = sbr.rel (0) target = $region13
    $region12: #{tpu_custom_call.1} parent=1 // pred_region
      _
    $region13: #{tpu_custom_call.1} parent=1 // pred_fallthru
      _
    // Predicated region
    $region14: #{tpu_custom_call.1} parent=1 // pred_check
      _
    $region15: #{tpu_custom_call.1} parent=1 // pred_check_branch
      %30 = sbr.rel (0) target = $region17
    $region16: #{tpu_custom_call.1} parent=1 // pred_region
      _
    $region17: #{tpu_custom_call.1} parent=1 // pred_fallthru
      _
    // Predicated region
    $region18: #{tpu_custom_call.1} parent=1 // pred_check
      _
    $region19: #{tpu_custom_call.1} parent=1 // pred_check_branch
      %32 = sbr.rel (0) target = $region21
    $region20: #{tpu_custom_call.1} parent=1 // pred_region
      _
    $region21: #{tpu_custom_call.1} parent=1 // pred_fallthru
      _
    // Predicated region
    $region22: #{tpu_custom_call.1} parent=1 // pred_check
      _
    $region23: #{tpu_custom_call.1} parent=1 // pred_check_branch
      %34 = sbr.rel (0) target = $region25
    $region24: #{tpu_custom_call.1} parent=1 // pred_region
      _
    $region25: #{tpu_custom_call.1} parent=1 // pred_fallthru
      _
    // Predicated region
    $region26: #{tpu_custom_call.1} parent=1 // pred_check
      _
    $region27: #{tpu_custom_call.1} parent=1 // pred_check_branch
      %36 = sbr.rel (0) target = $region29
    $region28: #{tpu_custom_call.1} parent=1 // pred_region
      %37 = dma.done [#allocation3], 512
    $region29: #{tpu_custom_call.1} parent=1 // pred_fallthru
      _
    %v38 = vld [vmem:[%s0] sm:$0xff]
    %v39 = vld [vmem:[#allocation2] sm:$0xff]
    %v40 = vld [vmem:[#allocation2 + $0x8] sm:$0xff]
    %v41 = vld [vmem:[#allocation2 + $0x10] sm:$0xff]
    %v42 = vld [vmem:[#allocation2 + $0x18] sm:$0xff]
    %v43 = vld [vmem:[%s2] sm:$0x1]
    %v45 = vlaneseq
    %v46 = vshrl.u32 %v45, 7
    %v47 = vsub.s32 0, %v46
    %v48 = vrot.slane %v43, %v47
    %vm50 = vcmask 261120
    %v52 = vsel %vm50, %v38, 0
    %54 = vmatprep.subr.mxu0 0.0
    %55 = vmatpush1.msra.mxu0 0.0
    %56 = vmatprep.subr.mxu0 0.0
    %57 = vmatpush1.msra.mxu0 0.0
    %58 = vmatprep.subr.mxu0 0.0
    %59 = vmatpush1.msra.mxu0 0.0
    %60 = vmatprep.subr.mxu0 0.0
    %61 = vmatpush1.msra.mxu0 0.0
    %62 = vmatprep.subr.mxu0 0.0
    %63 = vmatpush1.msra.mxu0 0.0
    %64 = vmatprep.subr.mxu0 0.0
    %65 = vmatpush1.msra.mxu0 0.0
    %66 = vmatprep.subr.mxu0 0.0
    %67 = vmatpush1.msra.mxu0 0.0
    %68 = vmatprep.subr.mxu0 0.0
    %69 = vmatpush1.msra.mxu0 0.0
    %70 = vmatprep.subr.mxu0 0.0
    %71 = vmatpush1.msra.mxu0 0.0
    %72 = vmatprep.subr.mxu0 0.0
    %73 = vmatpush1.msra.mxu0 0.0
    %74 = vmatprep.subr.mxu0 0.0
    %75 = vmatpush1.msra.mxu0 0.0
    %76 = vmatprep.subr.mxu0 0.0
    %77 = vmatpush1.msra.mxu0 0.0
    %78 = vmatprep.subr.mxu0 0.0
    %79 = vmatpush1.msra.mxu0 %v42
    %80 = vmatprep.subr.mxu0 0.0
    %81 = vmatpush1.msra.mxu0 %v41
    %82 = vmatprep.subr.mxu0 0.0
    %83 = vmatpush1.msra.mxu0 %v40
    %84 = vmatprep.subr.mxu0 0.0
    %85 = vmatpush1.msra.mxu0 %v39
    %86 = vmatprep.subr.mxu0 0.0
    %87 = vmatpush2.msra.mxu0 0.0
    %88 = vmatprep.subr.mxu0 0.0
    %89 = vmatpush2.msra.mxu0 0.0
    %90 = vmatprep.subr.mxu0 0.0
    %91 = vmatpush2.msra.mxu0 0.0
    %92 = vmatprep.subr.mxu0 0.0
    %93 = vmatpush2.msra.mxu0 0.0
    %94 = vmatprep.subr.mxu0 0.0
    %95 = vmatpush2.msra.mxu0 0.0
    %96 = vmatprep.subr.mxu0 0.0
    %97 = vmatpush2.msra.mxu0 0.0
    %98 = vmatprep.subr.mxu0 0.0
    %99 = vmatpush2.msra.mxu0 0.0
    %100 = vmatprep.subr.mxu0 0.0
    %101 = vmatpush2.msra.mxu0 0.0
    %102 = vmatprep.subr.mxu0 0.0
    %103 = vmatpush2.msra.mxu0 0.0
    %104 = vmatprep.subr.mxu0 0.0
    %105 = vmatpush2.msra.mxu0 0.0
    %106 = vmatprep.subr.mxu0 0.0
    %107 = vmatpush2.msra.mxu0 0.0
    %108 = vmatprep.subr.mxu0 0.0
    %109 = vmatpush2.msra.mxu0 0.0
    %110 = vmatprep.subr.mxu0 0.0
    %111 = vmatpush2.msra.mxu0 0.0
    %112 = vmatprep.subr.mxu0 0.0
    %113 = vmatpush2.msra.mxu0 0.0
    %114 = vmatprep.subr.mxu0 0.0
    %115 = vmatpush2.msra.mxu0 0.0
    %116 = vmatprep.subr.mxu0 0.0
    %117 = vmatpush2.msra.mxu0 0.0
    %118 = vmatprep.mubr.f32.mxu0 0.0
    %119 = vmatmul.mubr.f32.gmra.mxu0 %v52
    %v120 = vpop.f32.mrf.mxu0
    %v121 = vadd.f32 %v48, %v120
    %v122 = vpop.f32.mrf.mxu0
    %123 = vdwg.mxu0
    %v124 = vmax.f32 %v121, 0.0
    %v125 = vld [vmem:[%s3] sm:$0xff]
    %v126 = vld [vmem:[%s3 + $0x8] sm:$0xff]
    %v127 = vld [vmem:[%s3 + $0x10] sm:$0xff]
    %v128 = vld [vmem:[%s3 + $0x18] sm:$0xff]
    %v129 = vld [vmem:[%s3 + $0x20] sm:$0xff]
    %v130 = vld [vmem:[%s3 + $0x28] sm:$0xff]
    %v131 = vld [vmem:[%s3 + $0x30] sm:$0xff]
    %v132 = vld [vmem:[%s3 + $0x38] sm:$0xff]
    %v133 = vld [vmem:[%s3 + $0x40] sm:$0xff]
    %v134 = vld [vmem:[%s3 + $0x48] sm:$0xff]
    %v135 = vld [vmem:[%s3 + $0x50] sm:$0xff]
    %v136 = vld [vmem:[%s3 + $0x58] sm:$0xff]
    %v137 = vld [vmem:[%s3 + $0x60] sm:$0xff]
    %v138 = vld [vmem:[%s3 + $0x68] sm:$0xff]
    %v139 = vld [vmem:[%s3 + $0x70] sm:$0xff]
    %v140 = vld [vmem:[%s3 + $0x78] sm:$0xff]
    %v141 = vld [vmem:[%s4] sm:$0x1]
    %v143 = vlaneseq
    %v144 = vshrl.u32 %v143, 7
    %v145 = vsub.s32 0, %v144
    %v146 = vrot.slane %v141, %v145
    %148 = vmatprep.subr.mxu0 0.0
    %149 = vmatpush1.msra.mxu0 %v140
    %150 = vmatprep.subr.mxu0 0.0
    %151 = vmatpush1.msra.mxu0 %v139
    %152 = vmatprep.subr.mxu0 0.0
    %153 = vmatpush1.msra.mxu0 %v138
    %154 = vmatprep.subr.mxu0 0.0
    %155 = vmatpush1.msra.mxu0 %v137
    %156 = vmatprep.subr.mxu0 0.0
    %157 = vmatpush1.msra.mxu0 %v136
    %158 = vmatprep.subr.mxu0 0.0
    %159 = vmatpush1.msra.mxu0 %v135
    %160 = vmatprep.subr.mxu0 0.0
    %161 = vmatpush1.msra.mxu0 %v134
    %162 = vmatprep.subr.mxu0 0.0
    %163 = vmatpush1.msra.mxu0 %v133
    %164 = vmatprep.subr.mxu0 0.0
    %165 = vmatpush1.msra.mxu0 %v132
    %166 = vmatprep.subr.mxu0 0.0
    %167 = vmatpush1.msra.mxu0 %v131
    %168 = vmatprep.subr.mxu0 0.0
    %169 = vmatpush1.msra.mxu0 %v130
    %170 = vmatprep.subr.mxu0 0.0
    %171 = vmatpush1.msra.mxu0 %v129
    %172 = vmatprep.subr.mxu0 0.0
    %173 = vmatpush1.msra.mxu0 %v128
    %174 = vmatprep.subr.mxu0 0.0
    %175 = vmatpush1.msra.mxu0 %v127
    %176 = vmatprep.subr.mxu0 0.0
    %177 = vmatpush1.msra.mxu0 %v126
    %178 = vmatprep.subr.mxu0 0.0
    %179 = vmatpush1.msra.mxu0 %v125
    %180 = vmatprep.subr.mxu0 0.0
    %181 = vmatpush2.msra.mxu0 0.0
    %182 = vmatprep.subr.mxu0 0.0
    %183 = vmatpush2.msra.mxu0 0.0
    %184 = vmatprep.subr.mxu0 0.0
    %185 = vmatpush2.msra.mxu0 0.0
    %186 = vmatprep.subr.mxu0 0.0
    %187 = vmatpush2.msra.mxu0 0.0
    %188 = vmatprep.subr.mxu0 0.0
    %189 = vmatpush2.msra.mxu0 0.0
    %190 = vmatprep.subr.mxu0 0.0
    %191 = vmatpush2.msra.mxu0 0.0
    %192 = vmatprep.subr.mxu0 0.0
    %193 = vmatpush2.msra.mxu0 0.0
    %194 = vmatprep.subr.mxu0 0.0
    %195 = vmatpush2.msra.mxu0 0.0
    %196 = vmatprep.subr.mxu0 0.0
    %197 = vmatpush2.msra.mxu0 0.0
    %198 = vmatprep.subr.mxu0 0.0
    %199 = vmatpush2.msra.mxu0 0.0
    %200 = vmatprep.subr.mxu0 0.0
    %201 = vmatpush2.msra.mxu0 0.0
    %202 = vmatprep.subr.mxu0 0.0
    %203 = vmatpush2.msra.mxu0 0.0
    %204 = vmatprep.subr.mxu0 0.0
    %205 = vmatpush2.msra.mxu0 0.0
    %206 = vmatprep.subr.mxu0 0.0
    %207 = vmatpush2.msra.mxu0 0.0
    %208 = vmatprep.subr.mxu0 0.0
    %209 = vmatpush2.msra.mxu0 0.0
    %210 = vmatprep.subr.mxu0 0.0
    %211 = vmatpush2.msra.mxu0 0.0
    %212 = vmatprep.mubr.f32.mxu0 0.0
    %213 = vmatmul.mubr.f32.gmra.mxu0 %v124
    %v214 = vpop.f32.mrf.mxu0
    %v215 = vadd.f32 %v146, %v214
    %v216 = vpop.f32.mrf.mxu0
    %217 = vdwg.mxu0
    %v218 = vmax.f32 %v215, 0.0
    %v219 = vld [vmem:[%s5] sm:$0xff]
    %v220 = vld [vmem:[%s5 + $0x8] sm:$0xff]
    %v221 = vld [vmem:[%s5 + $0x10] sm:$0xff]
    %v222 = vld [vmem:[%s5 + $0x18] sm:$0xff]
    %v223 = vld [vmem:[%s5 + $0x20] sm:$0xff]
    %v224 = vld [vmem:[%s5 + $0x28] sm:$0xff]
    %v225 = vld [vmem:[%s5 + $0x30] sm:$0xff]
    %v226 = vld [vmem:[%s5 + $0x38] sm:$0xff]
    %v227 = vld [vmem:[%s5 + $0x40] sm:$0xff]
    %v228 = vld [vmem:[%s5 + $0x48] sm:$0xff]
    %v229 = vld [vmem:[%s5 + $0x50] sm:$0xff]
    %v230 = vld [vmem:[%s5 + $0x58] sm:$0xff]
    %v231 = vld [vmem:[%s5 + $0x60] sm:$0xff]
    %v232 = vld [vmem:[%s5 + $0x68] sm:$0xff]
    %v233 = vld [vmem:[%s5 + $0x70] sm:$0xff]
    %v234 = vld [vmem:[%s5 + $0x78] sm:$0xff]
    %235 = vmatprep.subr.mxu0 0.0
    %236 = vmatpush1.msra.mxu0 %v234
    %237 = vmatprep.subr.mxu0 0.0
    %238 = vmatpush1.msra.mxu0 %v233
    %239 = vmatprep.subr.mxu0 0.0
    %240 = vmatpush1.msra.mxu0 %v232
    %241 = vmatprep.subr.mxu0 0.0
    %242 = vmatpush1.msra.mxu0 %v231
    %243 = vmatprep.subr.mxu0 0.0
    %244 = vmatpush1.msra.mxu0 %v230
    %245 = vmatprep.subr.mxu0 0.0
    %246 = vmatpush1.msra.mxu0 %v229
    %247 = vmatprep.subr.mxu0 0.0
    %248 = vmatpush1.msra.mxu0 %v228
    %249 = vmatprep.subr.mxu0 0.0
    %250 = vmatpush1.msra.mxu0 %v227
    %251 = vmatprep.subr.mxu0 0.0
    %252 = vmatpush1.msra.mxu0 %v226
    %253 = vmatprep.subr.mxu0 0.0
    %254 = vmatpush1.msra.mxu0 %v225
    %255 = vmatprep.subr.mxu0 0.0
    %256 = vmatpush1.msra.mxu0 %v224
    %257 = vmatprep.subr.mxu0 0.0
    %258 = vmatpush1.msra.mxu0 %v223
    %259 = vmatprep.subr.mxu0 0.0
    %260 = vmatpush1.msra.mxu0 %v222
    %261 = vmatprep.subr.mxu0 0.0
    %262 = vmatpush1.msra.mxu0 %v221
    %263 = vmatprep.subr.mxu0 0.0
    %264 = vmatpush1.msra.mxu0 %v220
    %265 = vmatprep.subr.mxu0 0.0
    %266 = vmatpush1.msra.mxu0 %v219
    %267 = vmatprep.subr.mxu0 0.0
    %268 = vmatpush2.msra.mxu0 0.0
    %269 = vmatprep.subr.mxu0 0.0
    %270 = vmatpush2.msra.mxu0 0.0
    %271 = vmatprep.subr.mxu0 0.0
    %272 = vmatpush2.msra.mxu0 0.0
    %273 = vmatprep.subr.mxu0 0.0
    %274 = vmatpush2.msra.mxu0 0.0
    %275 = vmatprep.subr.mxu0 0.0
    %276 = vmatpush2.msra.mxu0 0.0
    %277 = vmatprep.subr.mxu0 0.0
    %278 = vmatpush2.msra.mxu0 0.0
    %279 = vmatprep.subr.mxu0 0.0
    %280 = vmatpush2.msra.mxu0 0.0
    %281 = vmatprep.subr.mxu0 0.0
    %282 = vmatpush2.msra.mxu0 0.0
    %283 = vmatprep.subr.mxu0 0.0
    %284 = vmatpush2.msra.mxu0 0.0
    %285 = vmatprep.subr.mxu0 0.0
    %286 = vmatpush2.msra.mxu0 0.0
    %287 = vmatprep.subr.mxu0 0.0
    %288 = vmatpush2.msra.mxu0 0.0
    %289 = vmatprep.subr.mxu0 0.0
    %290 = vmatpush2.msra.mxu0 0.0
    %291 = vmatprep.subr.mxu0 0.0
    %292 = vmatpush2.msra.mxu0 0.0
    %293 = vmatprep.subr.mxu0 0.0
    %294 = vmatpush2.msra.mxu0 0.0
    %295 = vmatprep.subr.mxu0 0.0
    %296 = vmatpush2.msra.mxu0 0.0
    %297 = vmatprep.subr.mxu0 0.0
    %298 = vmatpush2.msra.mxu0 0.0
    %299 = vmatprep.mubr.f32.mxu0 0.0
    %300 = vmatmul.mubr.f32.gmra.mxu0 %v218
    %v301 = vpop.f32.mrf.mxu0
    %v302 = vadd.f32 0.0, %v301
    %v303 = vpop.f32.mrf.mxu0
    %304 = vdwg.mxu0
    %vm305 = vcmask 130048
    %306 = vst.msk [vmem:[#allocation5] sm:$0xff] %vm305, %v302
    // Predicated region
    $region30: #{tpu_custom_call.1} parent=1 // pred_check
      _
    $region31: #{tpu_custom_call.1} parent=1 // pred_check_branch
      %308 = sbr.rel (0) target = $region33
    $region32: #{tpu_custom_call.1} parent=1 // pred_region
      %s310 = ssub.s32 128, 128
      %311 = vsyncadd [#allocation4], %s310
      %s313 = sshll.u32 [#allocation5], 4
      %s314 = int_to_ptr.vmem [resolvable:$true] %s313
      %316 = dma.vmem_to_hbm [thread:$0]  %s314, 128, %s6, [#allocation4]
    $region33: #{tpu_custom_call.1} parent=1 // pred_fallthru
      _
    // Predicated region
    $region34: #{tpu_custom_call.1} parent=1 // pred_check
      _
    $region35: #{tpu_custom_call.1} parent=1 // pred_check_branch
      %318 = sbr.rel (0) target = $region37
    $region36: #{tpu_custom_call.1} parent=1 // pred_region
      %319 = dma.done [#allocation4], 128
    $region37: #{tpu_custom_call.1} parent=1 // pred_fallthru
      _
    %320 = vsyncpa [#allocation3], 1
    %321 = vsyncpa [#allocation4], 1

</llo_original>
